<compile_context>
chip_gen: v5e
topology: v5e:2x2
jax: 0.10.0
libtpu: 0.0.40
codegen_flags: <defaults>
</compile_context>

<pallas_src>
import jax
import jax.numpy as jnp
from jax.experimental import pallas as pl
from jax.experimental.pallas import tpu as pltpu

NEURO = 128        # hidden width (matches `neuro_number` in the PyTorch module)
LANE = 128
N_HIDDEN_MM = 4    # layers 2..5 (the 128x128 hidden matmuls)


def _round_up(x, m):
    return (x + m - 1) // m * m


def _mlp_kernel(x_ref, w1_ref, b15_ref, wh_ref, w6_ref, b6_ref, o_ref, acc_ref):
    """Forward pass for one (tb, tk) activation tile.

    Grid = (batch tiles, layer-1 K tiles).  Layer-1 partial products accumulate
    into an f32 VMEM scratch; the remaining 5 layers run on the last K step.
    """
    k = pl.program_id(1)
    nk = pl.num_programs(1)

    @pl.when(k == 0)
    def _():
        acc_ref[...] = jnp.zeros_like(acc_ref)

    # Layer-1 partial matmul: bf16 operands on the MXU, f32 accumulation.
    acc_ref[...] += jnp.dot(x_ref[...], w1_ref[...],
                            preferred_element_type=jnp.float32)

    @pl.when(k == nk - 1)
    def _():
        b15 = b15_ref[...]                                   # (5, 1, 128) f32
        h = jnp.maximum(acc_ref[...] + b15[0], 0.0).astype(jnp.bfloat16)
        # TODO(synk): on v5e, sub-tile rows (128-256 at a time) here so the f32
        # intermediates stay in vregs instead of spilling to VMEM.
        for j in range(N_HIDDEN_MM):                         # layers 2..5
            a = jnp.dot(h, wh_ref[j], preferred_element_type=jnp.float32) + b15[j + 1]
            h = jnp.maximum(a, 0.0).astype(jnp.bfloat16)
        out = jnp.dot(h, w6_ref[...], preferred_element_type=jnp.float32) + b6_ref[...]
        o_ref[...] = out.astype(o_ref.dtype)


def forward_net(x, params, *, vmem_budget_bytes=20 << 20):
    """JAX wrapper reproducing Forward_net.forward (dropout p=0.0 omitted).

    x: array of shape [B, ...]  (flattened to [B, D_in] like nn.Flatten)
    params: list of 6 (W, b) pairs, W: [in, out], b: [out]  (float32)
    """
    B = x.shape[0]
    x_bf = x.reshape(B, -1).astype(jnp.bfloat16)    # Flatten + cast BEFORE padding
    D_in = x_bf.shape[1]
    D_out = params[-1][0].shape[1]

    D_in_pad = _round_up(D_in, LANE)
    D_out_pad = _round_up(D_out, LANE)

    # K tile for layer 1: largest multiple of 128 (<=512) that divides D_in_pad,
    # so K blocks are never ragged (garbage K columns would corrupt every row).
    tk = LANE
    for cand in (512, 384, 256, LANE):
        if D_in_pad % cand == 0:
            tk = cand
            break

    # ---- batch tile from a VMEM budget (double-buffered streams + resident weights)
    w_bytes = 2 * ((tk + N_HIDDEN_MM * NEURO + D_out_pad) * NEURO) * 2   # dbuf bf16 weights
    b_bytes = 2 * (5 * NEURO + D_out_pad) * 4                            # dbuf f32 biases
    per_row = (2 * tk * 2            # x tile, double-buffered bf16
               + 2 * D_out_pad * 2   # out tile, double-buffered bf16
               + NEURO * 4           # f32 layer-1 accumulator scratch
               + 2 * NEURO * 4)      # headroom for in-kernel intermediates
    tb_budget = (vmem_budget_bytes - w_bytes - b_bytes) // per_row
    tb_budget = max(16, (tb_budget // 16) * 16)

    # Keep >= ~4 batch-grid steps when B allows it (v7x megacore sharding).
    pad_b = (-B) % 16
    B_p = B + pad_b
    tb_par = _round_up(pl.cdiv(B_p, 4), 16)
    tb = max(16, min(tb_budget, tb_par, 1024))

    # Single cheap bf16 pad pass: zero K columns (required; matched by zero rows
    # in W1) and batch rows up to a multiple of 16 only.
    pad_k = D_in_pad - D_in
    if pad_k or pad_b:
        x_bf = jnp.pad(x_bf, ((0, pad_b), (0, pad_k)))

    # ---- pack parameters -----------------------------------------------------
    (w1, b1), (w2, b2), (w3, b3), (w4, b4), (w5, b5), (w6, b6) = [
        (jnp.asarray(w, jnp.float32), jnp.asarray(b, jnp.float32)) for (w, b) in params
    ]
    w1 = jnp.pad(w1, ((0, D_in_pad - w1.shape[0]), (0, 0))).astype(jnp.bfloat16)
    wh = jnp.stack([w2, w3, w4, w5]).astype(jnp.bfloat16)               # (4,128,128)
    w6 = jnp.pad(w6, ((0, 0), (0, D_out_pad - w6.shape[1]))).astype(jnp.bfloat16)
    b15 = jnp.stack([b1, b2, b3, b4, b5]).reshape(5, 1, NEURO)           # f32
    b6 = jnp.pad(b6, (0, D_out_pad - b6.shape[0])).reshape(1, D_out_pad)  # f32

    grid = (pl.cdiv(B_p, tb), D_in_pad // tk)

    in_specs = [
        pl.BlockSpec((tb, tk), lambda i, k: (i, k)),                     # activations
        pl.BlockSpec((tk, NEURO), lambda i, k: (k, 0)),                  # W1 (K-tiled)
        pl.BlockSpec((5, 1, NEURO), lambda i, k: (0, 0, 0)),             # b1..b5 (resident)
        pl.BlockSpec((N_HIDDEN_MM, NEURO, NEURO), lambda i, k: (0, 0, 0)),  # W2..W5
        pl.BlockSpec((NEURO, D_out_pad), lambda i, k: (0, 0)),           # W6
        pl.BlockSpec((1, D_out_pad), lambda i, k: (0, 0)),               # b6
    ]
    out_spec = pl.BlockSpec((tb, D_out_pad), lambda i, k: (i, 0))

    # Explicit scoped-VMEM limit from the actual footprint (+ headroom), clamped
    # to stay inside v7x's 64 MiB physical VMEM.
    est_vmem = (2 * tb * tk * 2 + 2 * tb * D_out_pad * 2 + tb * NEURO * 4
                + w_bytes + b_bytes + 4 * tb * NEURO * 4)
    vmem_limit = int(min(max(2 * est_vmem, 32 << 20), 48 << 20))

    flops = 2 * B_p * (D_in_pad * NEURO + N_HIDDEN_MM * NEURO * NEURO + NEURO * D_out_pad)
    bytes_accessed = int(x_bf.size * 2 + B_p * D_out_pad * 2
                         + (w1.size + wh.size + w6.size) * 2
                         + (b15.size + b6.size) * 4)

    fn = pl.pallas_call(
        _mlp_kernel,
        out_shape=jax.ShapeDtypeStruct((B_p, D_out_pad), jnp.bfloat16),
        grid=grid,
        in_specs=in_specs,
        out_specs=out_spec,
        scratch_shapes=[pltpu.VMEM((tb, NEURO), jnp.float32)],
        compiler_params=pltpu.CompilerParams(
            dimension_semantics=("parallel", "arbitrary"),
            vmem_limit_bytes=vmem_limit),
        cost_estimate=pl.CostEstimate(flops=flops, transcendentals=0,
                                      bytes_accessed=bytes_accessed),
    )
    out = fn(x_bf, w1, b15, wh, w6, b6)
    # Module's output dtype is f32; the kernel writes bf16 to halve writeback.
    return out[:B, :D_out].astype(jnp.float32)


def init_params(key, d_in, d_out):
    """Deterministic init mimicking nn.Linear default U(-1/sqrt(fan_in), +1/sqrt(fan_in))."""
    dims = [d_in] + [NEURO] * 5 + [d_out]
    params = []
    for i in range(6):
        fan_in, fan_out = dims[i], dims[i + 1]
        key, kw, kb = jax.random.split(key, 3)
        bound = 1.0 / jnp.sqrt(jnp.float32(fan_in))
        w = jax.random.uniform(kw, (fan_in, fan_out), jnp.float32, -bound, bound)
        b = jax.random.uniform(kb, (fan_out,), jnp.float32, -bound, bound)
        params.append((w, b))
    return params


if __name__ == "__main__":
    key = jax.random.PRNGKey(0)
    k_x, k_p = jax.random.split(key)

    # Small example: batch=8, input that flattens to D_in=32, D_out=8.
    B, D_in, D_out = 8, 32, 8
    x = jax.random.normal(k_x, (B, 4, 8), jnp.float32)    # Flatten -> (8, 32)
    params = init_params(k_p, D_in, D_out)

    out = forward_net(x, params)
    out = jax.block_until_ready(out)
    assert out.shape == (B, D_out)

    # Reference with the same precision path (bf16 weights/acts, f32 accumulate,
    # bf16 final store).
    def ref_bf16(x, params):
        h = x.reshape(x.shape[0], -1).astype(jnp.bfloat16)
        for i, (w, b) in enumerate(params):
            h = jnp.dot(h, w.astype(jnp.bfloat16),
                        preferred_element_type=jnp.float32) + b
            if i < len(params) - 1:
                h = jnp.maximum(h, 0.0).astype(jnp.bfloat16)
        return h.astype(jnp.bfloat16).astype(jnp.float32)

    # Full-f32 reference of the original PyTorch math (loose tolerance vs bf16 path).
    def ref_f32(x, params):
        h = x.reshape(x.shape[0], -1)
        for i, (w, b) in enumerate(params):
            h = h @ w + b
            if i < len(params) - 1:
                h = jnp.maximum(h, 0.0)
        return h

    r_bf16 = jax.block_until_ready(ref_bf16(x, params))
    r_f32 = jax.block_until_ready(ref_f32(x, params))
    assert jnp.allclose(out, r_bf16, atol=1e-2, rtol=1e-2), "mismatch vs bf16 reference"
    assert jnp.allclose(out, r_f32, atol=5e-2, rtol=5e-2), "mismatch vs f32 reference"

    print("KERNEL_OK")
</pallas_src>

<mosaic_0001>
module attributes {stable_mosaic.version = 11 : i64} {
  func.func @_mlp_kernel(%arg0: i32, %arg1: i32, %arg2: memref<16x128xbf16, #tpu.memory_space<vmem>>, %arg3: memref<128x128xbf16, #tpu.memory_space<vmem>>, %arg4: memref<5x1x128xf32, #tpu.memory_space<vmem>>, %arg5: memref<4x128x128xbf16, #tpu.memory_space<vmem>>, %arg6: memref<128x128xbf16, #tpu.memory_space<vmem>>, %arg7: memref<1x128xf32, #tpu.memory_space<vmem>>, %arg8: memref<16x128xbf16, #tpu.memory_space<vmem>>, %arg9: memref<16x128xf32, #tpu.memory_space<vmem>>) attributes {dimension_semantics = [#tpu.dimension_semantics<parallel>, #tpu.dimension_semantics<arbitrary>], iteration_bounds = array<i64: 1, 1>, scalar_prefetch = 0 : i64, scratch_operands = 1 : i64, tpu.core_type = #tpu.core_type<tc>, window_params = [{transform_indices = @transform_0, window_bounds = array<i64: 16, 128>}, {transform_indices = @transform_1, window_bounds = array<i64: 128, 128>}, {pipeline_mode = #tpu.pipeline_mode<synchronous>, transform_indices = @transform_2, window_bounds = array<i64: 5, 1, 128>}, {pipeline_mode = #tpu.pipeline_mode<synchronous>, transform_indices = @transform_3, window_bounds = array<i64: 4, 128, 128>}, {pipeline_mode = #tpu.pipeline_mode<synchronous>, transform_indices = @transform_4, window_bounds = array<i64: 128, 128>}, {pipeline_mode = #tpu.pipeline_mode<synchronous>, transform_indices = @transform_5, window_bounds = array<i64: 1, 128>}, {transform_indices = @transform_6, window_bounds = array<i64: 16, 128>}]} {
    %c0_i32 = arith.constant 0 : i32
    %0 = arith.cmpi eq, %arg1, %c0_i32 : i32
    %1 = arith.extui %0 : i1 to i32
    %c0_i32_0 = arith.constant 0 : i32
    %2 = arith.cmpi ne, %1, %c0_i32_0 : i32
    scf.if %2 {
      %cst_10 = arith.constant 0.000000e+00 : f32
      %12 = vector.broadcast %cst_10 : f32 to vector<16x128xf32>
      %c0_11 = arith.constant 0 : index
      %c0_12 = arith.constant 0 : index
      %13 = vector.load %arg9[%c0_11, %c0_12] : memref<16x128xf32, #tpu.memory_space<vmem>>, vector<16x128xf32>
      tpu.vector_store %arg9[%c0_11, %c0_12], %12 {strides = array<i32>} : memref<16x128xf32, #tpu.memory_space<vmem>>, vector<16x128xf32>,
    } else {
    }
    %c0 = arith.constant 0 : index
    %c0_1 = arith.constant 0 : index
    %3 = vector.load %arg9[%c0, %c0_1] : memref<16x128xf32, #tpu.memory_space<vmem>>, vector<16x128xf32>
    %c0_2 = arith.constant 0 : index
    %c0_3 = arith.constant 0 : index
    %4 = vector.load %arg2[%c0_2, %c0_3] : memref<16x128xbf16, #tpu.memory_space<vmem>>, vector<16x128xbf16>
    %c0_4 = arith.constant 0 : index
    %c0_5 = arith.constant 0 : index
    %5 = vector.load %arg3[%c0_4, %c0_5] : memref<128x128xbf16, #tpu.memory_space<vmem>>, vector<128x128xbf16>
    %cst = arith.constant dense<0.000000e+00> : vector<16x128xf32>
    %6 = tpu.matmul %4, %5, %cst {dimension_numbers = #tpu.dot_dimension_numbers<[1], [0], [0], [1], [0, 0, 1, 1], [], []>} : vector<16x128xbf16>, vector<128x128xbf16>, vector<16x128xf32> -> vector<16x128xf32>
    %7 = arith.addf %3, %6 : vector<16x128xf32>
    %c0_6 = arith.constant 0 : index
    %c0_7 = arith.constant 0 : index
    %8 = vector.load %arg9[%c0_6, %c0_7] : memref<16x128xf32, #tpu.memory_space<vmem>>, vector<16x128xf32>
    tpu.vector_store %arg9[%c0_6, %c0_7], %7 {strides = array<i32>} : memref<16x128xf32, #tpu.memory_space<vmem>>, vector<16x128xf32>,
    %c0_i32_8 = arith.constant 0 : i32
    %9 = arith.cmpi eq, %arg1, %c0_i32_8 : i32
    %10 = arith.extui %9 : i1 to i32
    %c0_i32_9 = arith.constant 0 : i32
    %11 = arith.cmpi ne, %10, %c0_i32_9 : i32
    scf.if %11 {
      %c0_10 = arith.constant 0 : index
      %c0_11 = arith.constant 0 : index
      %c0_12 = arith.constant 0 : index
      %12 = vector.load %arg4[%c0_10, %c0_11, %c0_12] : memref<5x1x128xf32, #tpu.memory_space<vmem>>, vector<5x1x128xf32>
      %c0_13 = arith.constant 0 : index
      %c0_14 = arith.constant 0 : index
      %13 = vector.load %arg9[%c0_13, %c0_14] : memref<16x128xf32, #tpu.memory_space<vmem>>, vector<16x128xf32>
      %14 = vector.extract_strided_slice %12 {offsets = [0, 0, 0], sizes = [1, 1, 128], strides = [1, 1, 1]} : vector<5x1x128xf32> to vector<1x1x128xf32>
      %15 = vector.shape_cast %14 : vector<1x1x128xf32> to vector<1x128xf32>
      %16 = vector.broadcast %15 : vector<1x128xf32> to vector<16x128xf32>
      %17 = arith.addf %13, %16 : vector<16x128xf32>
      %cst_15 = arith.constant 0.000000e+00 : f32
      %18 = vector.broadcast %cst_15 : f32 to vector<16x128xf32>
      %19 = arith.maximumf %17, %18 : vector<16x128xf32>
      %20 = arith.truncf %19 : vector<16x128xf32> to vector<16x128xbf16>
      %c0_16 = arith.constant 0 : index
      %c0_17 = arith.constant 0 : index
      %c0_18 = arith.constant 0 : index
      %21 = vector.load %arg5[%c0_16, %c0_17, %c0_18] : memref<4x128x128xbf16, #tpu.memory_space<vmem>>, vector<1x128x128xbf16>
      %22 = vector.shape_cast %21 : vector<1x128x128xbf16> to vector<128x128xbf16>
      %cst_19 = arith.constant dense<0.000000e+00> : vector<16x128xf32>
      %23 = tpu.matmul %20, %22, %cst_19 {dimension_numbers = #tpu.dot_dimension_numbers<[1], [0], [0], [1], [0, 0, 1, 1], [], []>} : vector<16x128xbf16>, vector<128x128xbf16>, vector<16x128xf32> -> vector<16x128xf32>
      %24 = vector.extract_strided_slice %12 {offsets = [1, 0, 0], sizes = [1, 1, 128], strides = [1, 1, 1]} : vector<5x1x128xf32> to vector<1x1x128xf32>
      %25 = vector.shape_cast %24 : vector<1x1x128xf32> to vector<1x128xf32>
      %26 = vector.broadcast %25 : vector<1x128xf32> to vector<16x128xf32>
      %27 = arith.addf %23, %26 : vector<16x128xf32>
      %cst_20 = arith.constant 0.000000e+00 : f32
      %28 = vector.broadcast %cst_20 : f32 to vector<16x128xf32>
      %29 = arith.maximumf %27, %28 : vector<16x128xf32>
      %30 = arith.truncf %29 : vector<16x128xf32> to vector<16x128xbf16>
      %c1 = arith.constant 1 : index
      %c0_21 = arith.constant 0 : index
      %c0_22 = arith.constant 0 : index
      %31 = vector.load %arg5[%c1, %c0_21, %c0_22] : memref<4x128x128xbf16, #tpu.memory_space<vmem>>, vector<1x128x128xbf16>
      %32 = vector.shape_cast %31 : vector<1x128x128xbf16> to vector<128x128xbf16>
      %cst_23 = arith.constant dense<0.000000e+00> : vector<16x128xf32>
      %33 = tpu.matmul %30, %32, %cst_23 {dimension_numbers = #tpu.dot_dimension_numbers<[1], [0], [0], [1], [0, 0, 1, 1], [], []>} : vector<16x128xbf16>, vector<128x128xbf16>, vector<16x128xf32> -> vector<16x128xf32>
      %34 = vector.extract_strided_slice %12 {offsets = [2, 0, 0], sizes = [1, 1, 128], strides = [1, 1, 1]} : vector<5x1x128xf32> to vector<1x1x128xf32>
      %35 = vector.shape_cast %34 : vector<1x1x128xf32> to vector<1x128xf32>
      %36 = vector.broadcast %35 : vector<1x128xf32> to vector<16x128xf32>
      %37 = arith.addf %33, %36 : vector<16x128xf32>
      %cst_24 = arith.constant 0.000000e+00 : f32
      %38 = vector.broadcast %cst_24 : f32 to vector<16x128xf32>
      %39 = arith.maximumf %37, %38 : vector<16x128xf32>
      %40 = arith.truncf %39 : vector<16x128xf32> to vector<16x128xbf16>
      %c2 = arith.constant 2 : index
      %c0_25 = arith.constant 0 : index
      %c0_26 = arith.constant 0 : index
      %41 = vector.load %arg5[%c2, %c0_25, %c0_26] : memref<4x128x128xbf16, #tpu.memory_space<vmem>>, vector<1x128x128xbf16>
      %42 = vector.shape_cast %41 : vector<1x128x128xbf16> to vector<128x128xbf16>
      %cst_27 = arith.constant dense<0.000000e+00> : vector<16x128xf32>
      %43 = tpu.matmul %40, %42, %cst_27 {dimension_numbers = #tpu.dot_dimension_numbers<[1], [0], [0], [1], [0, 0, 1, 1], [], []>} : vector<16x128xbf16>, vector<128x128xbf16>, vector<16x128xf32> -> vector<16x128xf32>
      %44 = vector.extract_strided_slice %12 {offsets = [3, 0, 0], sizes = [1, 1, 128], strides = [1, 1, 1]} : vector<5x1x128xf32> to vector<1x1x128xf32>
      %45 = vector.shape_cast %44 : vector<1x1x128xf32> to vector<1x128xf32>
      %46 = vector.broadcast %45 : vector<1x128xf32> to vector<16x128xf32>
      %47 = arith.addf %43, %46 : vector<16x128xf32>
      %cst_28 = arith.constant 0.000000e+00 : f32
      %48 = vector.broadcast %cst_28 : f32 to vector<16x128xf32>
      %49 = arith.maximumf %47, %48 : vector<16x128xf32>
      %50 = arith.truncf %49 : vector<16x128xf32> to vector<16x128xbf16>
      %c3 = arith.constant 3 : index
      %c0_29 = arith.constant 0 : index
      %c0_30 = arith.constant 0 : index
      %51 = vector.load %arg5[%c3, %c0_29, %c0_30] : memref<4x128x128xbf16, #tpu.memory_space<vmem>>, vector<1x128x128xbf16>
      %52 = vector.shape_cast %51 : vector<1x128x128xbf16> to vector<128x128xbf16>
      %cst_31 = arith.constant dense<0.000000e+00> : vector<16x128xf32>
      %53 = tpu.matmul %50, %52, %cst_31 {dimension_numbers = #tpu.dot_dimension_numbers<[1], [0], [0], [1], [0, 0, 1, 1], [], []>} : vector<16x128xbf16>, vector<128x128xbf16>, vector<16x128xf32> -> vector<16x128xf32>
      %54 = vector.extract_strided_slice %12 {offsets = [4, 0, 0], sizes = [1, 1, 128], strides = [1, 1, 1]} : vector<5x1x128xf32> to vector<1x1x128xf32>
      %55 = vector.shape_cast %54 : vector<1x1x128xf32> to vector<1x128xf32>
      %56 = vector.broadcast %55 : vector<1x128xf32> to vector<16x128xf32>
      %57 = arith.addf %53, %56 : vector<16x128xf32>
      %cst_32 = arith.constant 0.000000e+00 : f32
      %58 = vector.broadcast %cst_32 : f32 to vector<16x128xf32>
      %59 = arith.maximumf %57, %58 : vector<16x128xf32>
      %60 = arith.truncf %59 : vector<16x128xf32> to vector<16x128xbf16>
      %c0_33 = arith.constant 0 : index
      %c0_34 = arith.constant 0 : index
      %61 = vector.load %arg6[%c0_33, %c0_34] : memref<128x128xbf16, #tpu.memory_space<vmem>>, vector<128x128xbf16>
      %cst_35 = arith.constant dense<0.000000e+00> : vector<16x128xf32>
      %62 = tpu.matmul %60, %61, %cst_35 {dimension_numbers = #tpu.dot_dimension_numbers<[1], [0], [0], [1], [0, 0, 1, 1], [], []>} : vector<16x128xbf16>, vector<128x128xbf16>, vector<16x128xf32> -> vector<16x128xf32>
      %c0_36 = arith.constant 0 : index
      %c0_37 = arith.constant 0 : index
      %63 = vector.load %arg7[%c0_36, %c0_37] : memref<1x128xf32, #tpu.memory_space<vmem>>, vector<1x128xf32>
      %64 = vector.broadcast %63 : vector<1x128xf32> to vector<16x128xf32>
      %65 = arith.addf %62, %64 : vector<16x128xf32>
      %66 = arith.truncf %65 : vector<16x128xf32> to vector<16x128xbf16>
      %c0_38 = arith.constant 0 : index
      %c0_39 = arith.constant 0 : index
      %67 = vector.load %arg8[%c0_38, %c0_39] : memref<16x128xbf16, #tpu.memory_space<vmem>>, vector<16x128xbf16>
      tpu.vector_store %arg8[%c0_38, %c0_39], %66 {strides = array<i32>} : memref<16x128xbf16, #tpu.memory_space<vmem>>, vector<16x128xbf16>,
    } else {
    }
    return
  }
  func.func @transform_0(%arg0: i32, %arg1: i32) -> (i32, i32) {
    %c0_i32 = arith.constant 0 : i32
    return %arg0, %arg1 : i32, i32
  }
  func.func @transform_1(%arg0: i32, %arg1: i32) -> (i32, i32) {
    %c0_i32 = arith.constant 0 : i32
    %c0_i32_0 = arith.constant 0 : i32
    return %arg1, %c0_i32 : i32, i32
  }
  func.func @transform_2(%arg0: i32, %arg1: i32) -> (i32, i32, i32) {
    %c0_i32 = arith.constant 0 : i32
    %c0_i32_0 = arith.constant 0 : i32
    %c0_i32_1 = arith.constant 0 : i32
    %c0_i32_2 = arith.constant 0 : i32
    return %c0_i32, %c0_i32_0, %c0_i32_1 : i32, i32, i32
  }
  func.func @transform_3(%arg0: i32, %arg1: i32) -> (i32, i32, i32) {
    %c0_i32 = arith.constant 0 : i32
    %c0_i32_0 = arith.constant 0 : i32
    %c0_i32_1 = arith.constant 0 : i32
    %c0_i32_2 = arith.constant 0 : i32
    return %c0_i32, %c0_i32_0, %c0_i32_1 : i32, i32, i32
  }
  func.func @transform_4(%arg0: i32, %arg1: i32) -> (i32, i32) {
    %c0_i32 = arith.constant 0 : i32
    %c0_i32_0 = arith.constant 0 : i32
    %c0_i32_1 = arith.constant 0 : i32
    return %c0_i32, %c0_i32_0 : i32, i32
  }
  func.func @transform_5(%arg0: i32, %arg1: i32) -> (i32, i32) {
    %c0_i32 = arith.constant 0 : i32
    %c0_i32_0 = arith.constant 0 : i32
    %c0_i32_1 = arith.constant 0 : i32
    return %c0_i32, %c0_i32_0 : i32, i32
  }
  func.func @transform_6(%arg0: i32, %arg1: i32) -> (i32, i32) {
    %c0_i32 = arith.constant 0 : i32
    %c0_i32_0 = arith.constant 0 : i32
    return %arg0, %c0_i32 : i32, i32
  }
}

</mosaic_0001>

<llo_original>
// kernel: tpu_custom_call.1
$region0: #{tpu_custom_call.1}
  #allocation0 [shape = 'u32[]', space=smem, size = 0x4, offset = 0x4, fixed_abs, tag = 'smem constant byte address 0x4 - core index']
  #allocation1 [shape = 'u32[72,128]{1,0:T(1,128)}', space=vmem, size = 0x9000, scoped, tag = 'internal scratch']
  #allocation2 [shape = 'f32[16,128]{1,0:T(8,128)}', space=vmem, size = 0x2000, scoped, tag = 'scratch operand']
  %s0 = inlined_call_operand.hbm [shape: bf16[16,128], index: 0, kind: input, shape index: {}]
  %s1 = inlined_call_operand.hbm [shape: bf16[128,128], index: 1, kind: input, shape index: {}]
  %s2 = inlined_call_operand.hbm [shape: f32[5,1,128], index: 2, kind: input, shape index: {}]
  %s3 = inlined_call_operand.hbm [shape: bf16[4,128,128], index: 3, kind: input, shape index: {}]
  %s4 = inlined_call_operand.hbm [shape: bf16[128,128], index: 4, kind: input, shape index: {}]
  %s5 = inlined_call_operand.vmem [shape: f32[1,128], index: 5, kind: input, shape index: {}]
  %s6 = inlined_call_operand.hbm [shape: bf16[16,128], index: 6, kind: output, shape index: {}]
  %s7 = sld [smem:[#allocation0]]
  $region62: #{tpu_custom_call.1} parent=0
    _
  %s9 = ssub.s32 1, %s7
  %s10 = scalar_select 0, %s9, %s7
  $region1: #{tpu_custom_call.1} parent=0
    #allocation3 [shape = 'u8[4096]{0}', space=vmem, size = 0x1000, scoped, tag = 'input window, operand 0, single buffered']
    #allocation4 [shape = 's32[1]{0}', space=sflag, size = 0x4, scoped, tag = 'scoped memory for tpu_custom_call.1']
    #allocation5 [shape = 's32[1]{0}', space=sflag, size = 0x4, scoped, tag = 'scoped memory for tpu_custom_call.1']
    #allocation6 [shape = 'u8[32768]{0}', space=vmem, size = 0x8000, scoped, tag = 'input window, operand 1, single buffered']
    #allocation7 [shape = 's32[1]{0}', space=sflag, size = 0x4, scoped, tag = 'scoped memory for tpu_custom_call.1']
    #allocation8 [shape = 'u8[2560]{0}', space=vmem, size = 0xc00, scoped, tag = 'input window, operand 2, single buffered']
    #allocation9 [shape = 'u8[131072]{0}', space=vmem, size = 0x20000, scoped, tag = 'input window, operand 3, single buffered']
    #allocation10 [shape = 's32[1]{0}', space=sflag, size = 0x4, scoped, tag = 'scoped memory for tpu_custom_call.1']
    #allocation11 [shape = 'u8[32768]{0}', space=vmem, size = 0x8000, scoped, tag = 'input window, operand 4, single buffered']
    #allocation12 [shape = 'u8[4096]{0}', space=vmem, size = 0x1000, scoped, tag = 'output window, operand 0, single buffered']
    %11 = vsyncpa [#allocation4], 0
    %12 = vsyncpa [#allocation7], 0
    %13 = vsyncpa [#allocation10], 0
    %14 = vsyncpa [#allocation5], 0
    // Predicated region
    $region2: #{tpu_custom_call.1} parent=1 // pred_check
      _
    $region3: #{tpu_custom_call.1} parent=1 // pred_check_branch
      %16 = sbr.rel (0) target = $region5
    $region4: #{tpu_custom_call.1} parent=1 // pred_region
      %18 = vsyncadd [#allocation4], 0
      %s19 = sshll.u32 %s0, 4
      %s20 = int_to_ptr.hbm [resolvable:$true] %s19
      %s21 = sshll.u32 [#allocation3], 4
      %s22 = int_to_ptr.vmem [resolvable:$true] %s21
      %27 = dma.hbm_to_vmem [thread:$0]  %s20, 128, %s22, [#allocation4], 64, 64, 4
    $region5: #{tpu_custom_call.1} parent=1 // pred_fallthru
      _
    // Predicated region
    $region6: #{tpu_custom_call.1} parent=1 // pred_check
      _
    $region7: #{tpu_custom_call.1} parent=1 // pred_check_branch
      %29 = sbr.rel (0) target = $region9
    $region8: #{tpu_custom_call.1} parent=1 // pred_region
      %31 = vsyncadd [#allocation7], 0
      %s32 = sshll.u32 %s1, 4
      %s33 = int_to_ptr.hbm [resolvable:$true] %s32
      %s34 = sshll.u32 [#allocation6], 4
      %s35 = int_to_ptr.vmem [resolvable:$true] %s34
      %40 = dma.hbm_to_vmem [thread:$0]  %s33, 1024, %s35, [#allocation7], 64, 64, 4
    $region9: #{tpu_custom_call.1} parent=1 // pred_fallthru
      _
    // Predicated region
    $region10: #{tpu_custom_call.1} parent=1 // pred_check
      _
    $region11: #{tpu_custom_call.1} parent=1 // pred_check_branch
      %42 = sbr.rel (0) target = $region13
    $region12: #{tpu_custom_call.1} parent=1 // pred_region
      %44 = vsyncadd [#allocation7], 0
      %s45 = sshll.u32 %s2, 4
      %s46 = int_to_ptr.hbm [resolvable:$true] %s45
      %s47 = sshll.u32 [#allocation8], 4
      %s48 = int_to_ptr.vmem [resolvable:$true] %s47
      %53 = dma.hbm_to_vmem [thread:$0]  %s46, 80, %s48, [#allocation7], 16, 16, 1
    $region13: #{tpu_custom_call.1} parent=1 // pred_fallthru
      _
    // Predicated region
    $region14: #{tpu_custom_call.1} parent=1 // pred_check
      _
    $region15: #{tpu_custom_call.1} parent=1 // pred_check_branch
      %55 = sbr.rel (0) target = $region17
    $region16: #{tpu_custom_call.1} parent=1 // pred_region
      %57 = vsyncadd [#allocation10], 0
      %s58 = sshll.u32 %s3, 4
      %s59 = int_to_ptr.hbm [resolvable:$true] %s58
      %s60 = sshll.u32 [#allocation9], 4
      %s61 = int_to_ptr.vmem [resolvable:$true] %s60
      %66 = dma.hbm_to_vmem [thread:$0]  %s59, 4096, %s61, [#allocation10], 64, 64, 4
    $region17: #{tpu_custom_call.1} parent=1 // pred_fallthru
      _
    // Predicated region
    $region18: #{tpu_custom_call.1} parent=1 // pred_check
      _
    $region19: #{tpu_custom_call.1} parent=1 // pred_check_branch
      %68 = sbr.rel (0) target = $region21
    $region20: #{tpu_custom_call.1} parent=1 // pred_region
      %70 = vsyncadd [#allocation10], 0
      %s71 = sshll.u32 %s4, 4
      %s72 = int_to_ptr.hbm [resolvable:$true] %s71
      %s73 = sshll.u32 [#allocation11], 4
      %s74 = int_to_ptr.vmem [resolvable:$true] %s73
      %79 = dma.hbm_to_vmem [thread:$0]  %s72, 1024, %s74, [#allocation10], 64, 64, 4
    $region21: #{tpu_custom_call.1} parent=1 // pred_fallthru
      _
    // Predicated region
    $region22: #{tpu_custom_call.1} parent=1 // pred_check
      _
    $region23: #{tpu_custom_call.1} parent=1 // pred_check_branch
      %81 = sbr.rel (0) target = $region25
    $region24: #{tpu_custom_call.1} parent=1 // pred_region
      _
    $region25: #{tpu_custom_call.1} parent=1 // pred_fallthru
      _
    // Predicated region
    $region26: #{tpu_custom_call.1} parent=1 // pred_check
      _
    $region27: #{tpu_custom_call.1} parent=1 // pred_check_branch
      %83 = sbr.rel (0) target = $region29
    $region28: #{tpu_custom_call.1} parent=1 // pred_region
      %85 = dma.done [#allocation4], 128
    $region29: #{tpu_custom_call.1} parent=1 // pred_fallthru
      _
    // Predicated region
    $region30: #{tpu_custom_call.1} parent=1 // pred_check
      _
    $region31: #{tpu_custom_call.1} parent=1 // pred_check_branch
      %87 = sbr.rel (0) target = $region33
    $region32: #{tpu_custom_call.1} parent=1 // pred_region
      %89 = dma.done [#allocation7], 1024
    $region33: #{tpu_custom_call.1} parent=1 // pred_fallthru
      _
    // Predicated region
    $region34: #{tpu_custom_call.1} parent=1 // pred_check
      _
    $region35: #{tpu_custom_call.1} parent=1 // pred_check_branch
      %91 = sbr.rel (0) target = $region37
    $region36: #{tpu_custom_call.1} parent=1 // pred_region
      %93 = dma.done [#allocation7], 80
    $region37: #{tpu_custom_call.1} parent=1 // pred_fallthru
      _
    // Predicated region
    $region38: #{tpu_custom_call.1} parent=1 // pred_check
      _
    $region39: #{tpu_custom_call.1} parent=1 // pred_check_branch
      %95 = sbr.rel (0) target = $region41
    $region40: #{tpu_custom_call.1} parent=1 // pred_region
      %97 = dma.done [#allocation10], 4096
    $region41: #{tpu_custom_call.1} parent=1 // pred_fallthru
      _
    // Predicated region
    $region42: #{tpu_custom_call.1} parent=1 // pred_check
      _
    $region43: #{tpu_custom_call.1} parent=1 // pred_check_branch
      %99 = sbr.rel (0) target = $region45
    $region44: #{tpu_custom_call.1} parent=1 // pred_region
      %101 = dma.done [#allocation10], 1024
    $region45: #{tpu_custom_call.1} parent=1 // pred_fallthru
      _
    %p102 = scmp.eq.s32.totalorder 0, 0
    // Predicated region
    $region46: #{tpu_custom_call.1} parent=1 // pred_check
      %p103 = pneg %p102
    $region47: #{tpu_custom_call.1} parent=1 // pred_check_branch
      %105 = sbr.rel (%p103) target = $region49
    $region48: #{tpu_custom_call.1} parent=1 // pred_region
      %106 = vst [vmem:[#allocation2] sm:$0xff] 0.0
      %107 = vst [vmem:[#allocation2 + $0x8] sm:$0xff] 0.0
    $region49: #{tpu_custom_call.1} parent=1 // pred_fallthru
      _
    %v108 = vld [vmem:[#allocation2] sm:$0xff]
    %v109 = vld [vmem:[#allocation2 + $0x8] sm:$0xff]
    %v110 = vld [vmem:[#allocation3] sm:$0xf]
    %v111 = vld [vmem:[#allocation3 + $0x4] sm:$0xf]
    %v112 = vld [vmem:[#allocation6] sm:$0xf]
    %v113 = vld [vmem:[#allocation6 + $0x4] sm:$0xf]
    %v114 = vld [vmem:[#allocation6 + $0x8] sm:$0xf]
    %v115 = vld [vmem:[#allocation6 + $0xc] sm:$0xf]
    %v116 = vld [vmem:[#allocation6 + $0x10] sm:$0xf]
    %v117 = vld [vmem:[#allocation6 + $0x14] sm:$0xf]
    %v118 = vld [vmem:[#allocation6 + $0x18] sm:$0xf]
    %v119 = vld [vmem:[#allocation6 + $0x1c] sm:$0xf]
    %v120 = vld [vmem:[#allocation6 + $0x20] sm:$0xf]
    %v121 = vld [vmem:[#allocation6 + $0x24] sm:$0xf]
    %v122 = vld [vmem:[#allocation6 + $0x28] sm:$0xf]
    %v123 = vld [vmem:[#allocation6 + $0x2c] sm:$0xf]
    %v124 = vld [vmem:[#allocation6 + $0x30] sm:$0xf]
    %v125 = vld [vmem:[#allocation6 + $0x34] sm:$0xf]
    %v126 = vld [vmem:[#allocation6 + $0x38] sm:$0xf]
    %v127 = vld [vmem:[#allocation6 + $0x3c] sm:$0xf]
    %v130 = vunpack.c.l.b16 %v110
    %v131 = vunpack.c.l.b16 %v111
    %v132 = vpack.c.b16 %v131, %v130
    %v150 = vunpack.c.l.b16 %v112
    %v151 = vunpack.c.l.b16 %v113
    %v152 = vunpack.c.l.b16 %v114
    %v153 = vunpack.c.l.b16 %v115
    %v154 = vunpack.c.l.b16 %v116
    %v155 = vunpack.c.l.b16 %v117
    %v156 = vunpack.c.l.b16 %v118
    %v157 = vunpack.c.l.b16 %v119
    %v158 = vunpack.c.l.b16 %v120
    %v159 = vunpack.c.l.b16 %v121
    %v160 = vunpack.c.l.b16 %v122
    %v161 = vunpack.c.l.b16 %v123
    %v162 = vunpack.c.l.b16 %v124
    %v163 = vunpack.c.l.b16 %v125
    %v164 = vunpack.c.l.b16 %v126
    %v165 = vunpack.c.l.b16 %v127
    %v166 = vpack.c.b16 %v151, %v150
    %v167 = vpack.c.b16 %v153, %v152
    %v168 = vpack.c.b16 %v155, %v154
    %v169 = vpack.c.b16 %v157, %v156
    %v170 = vpack.c.b16 %v159, %v158
    %v171 = vpack.c.b16 %v161, %v160
    %v172 = vpack.c.b16 %v163, %v162
    %v173 = vpack.c.b16 %v165, %v164
    %182 = vmatpush.bf16.msra.mxu0 %v173
    %183 = vmatpush.bf16.msra.mxu0 %v172
    %184 = vmatpush.bf16.msra.mxu0 %v171
    %185 = vmatpush.bf16.msra.mxu0 %v170
    %186 = vmatpush.bf16.msra.mxu0 %v169
    %187 = vmatpush.bf16.msra.mxu0 %v168
    %188 = vmatpush.bf16.msra.mxu0 %v167
    %189 = vmatpush.bf16.msra.mxu0 %v166
    %190 = vmatmul.bf16.gmra.mxu0 %v132
    %v191 = vpop.f32.mrf.mxu0
    %v192 = vadd.f32 0.0, %v191
    %v193 = vpop.f32.mrf.mxu0
    %v194 = vadd.f32 0.0, %v193
    %195 = vdwg.mxu0
    %v196 = vadd.f32 %v108, %v192
    %v197 = vadd.f32 %v109, %v194
    %198 = vst [vmem:[#allocation2] sm:$0xff] %v196
    %199 = vst [vmem:[#allocation2 + $0x8] sm:$0xff] %v197
    // Predicated region
    $region50: #{tpu_custom_call.1} parent=1 // pred_check
      %p200 = pneg %p102
    $region51: #{tpu_custom_call.1} parent=1 // pred_check_branch
      %202 = sbr.rel (%p200) target = $region53
    $region52: #{tpu_custom_call.1} parent=1 // pred_region
      %v203 = vld [vmem:[#allocation8] sm:$0x1]
      %v204 = vld [vmem:[#allocation8 + $0x1] sm:$0x1]
      %v205 = vld [vmem:[#allocation8 + $0x2] sm:$0x1]
      %v206 = vld [vmem:[#allocation8 + $0x3] sm:$0x1]
      %v207 = vld [vmem:[#allocation8 + $0x4] sm:$0x1]
      %v208 = vld [vmem:[#allocation2] sm:$0xff]
      %v209 = vld [vmem:[#allocation2 + $0x8] sm:$0xff]
      %v211 = vperm.slane %v203, 0
      %v213 = vadd.f32 %v208, %v211
      %v214 = vadd.f32 %v209, %v211
      %v215 = vmax.f32 %v213, 0.0
      %v216 = vmax.f32 %v214, 0.0
      %v217 = vpack.c.bf16 %v216, %v215
      %v218 = vld [vmem:[#allocation9] sm:$0xf]
      %v219 = vld [vmem:[#allocation9 + $0x4] sm:$0xf]
      %v220 = vld [vmem:[#allocation9 + $0x8] sm:$0xf]
      %v221 = vld [vmem:[#allocation9 + $0xc] sm:$0xf]
      %v222 = vld [vmem:[#allocation9 + $0x10] sm:$0xf]
      %v223 = vld [vmem:[#allocation9 + $0x14] sm:$0xf]
      %v224 = vld [vmem:[#allocation9 + $0x18] sm:$0xf]
      %v225 = vld [vmem:[#allocation9 + $0x1c] sm:$0xf]
      %v226 = vld [vmem:[#allocation9 + $0x20] sm:$0xf]
      %v227 = vld [vmem:[#allocation9 + $0x24] sm:$0xf]
      %v228 = vld [vmem:[#allocation9 + $0x28] sm:$0xf]
      %v229 = vld [vmem:[#allocation9 + $0x2c] sm:$0xf]
      %v230 = vld [vmem:[#allocation9 + $0x30] sm:$0xf]
      %v231 = vld [vmem:[#allocation9 + $0x34] sm:$0xf]
      %v232 = vld [vmem:[#allocation9 + $0x38] sm:$0xf]
      %v233 = vld [vmem:[#allocation9 + $0x3c] sm:$0xf]
      %v235 = vperm.slane %v204, 0
      %v253 = vunpack.c.l.b16 %v218
      %v254 = vunpack.c.l.b16 %v219
      %v255 = vunpack.c.l.b16 %v220
      %v256 = vunpack.c.l.b16 %v221
      %v257 = vunpack.c.l.b16 %v222
      %v258 = vunpack.c.l.b16 %v223
      %v259 = vunpack.c.l.b16 %v224
      %v260 = vunpack.c.l.b16 %v225
      %v261 = vunpack.c.l.b16 %v226
      %v262 = vunpack.c.l.b16 %v227
      %v263 = vunpack.c.l.b16 %v228
      %v264 = vunpack.c.l.b16 %v229
      %v265 = vunpack.c.l.b16 %v230
      %v266 = vunpack.c.l.b16 %v231
      %v267 = vunpack.c.l.b16 %v232
      %v268 = vunpack.c.l.b16 %v233
      %v269 = vpack.c.b16 %v254, %v253
      %v270 = vpack.c.b16 %v256, %v255
      %v271 = vpack.c.b16 %v258, %v257
      %v272 = vpack.c.b16 %v260, %v259
      %v273 = vpack.c.b16 %v262, %v261
      %v274 = vpack.c.b16 %v264, %v263
      %v275 = vpack.c.b16 %v266, %v265
      %v276 = vpack.c.b16 %v268, %v267
      %285 = vmatpush.bf16.msra.mxu0 %v276
      %286 = vmatpush.bf16.msra.mxu0 %v275
      %287 = vmatpush.bf16.msra.mxu0 %v274
      %288 = vmatpush.bf16.msra.mxu0 %v273
      %289 = vmatpush.bf16.msra.mxu0 %v272
      %290 = vmatpush.bf16.msra.mxu0 %v271
      %291 = vmatpush.bf16.msra.mxu0 %v270
      %292 = vmatpush.bf16.msra.mxu0 %v269
      %293 = vmatmul.bf16.gmra.mxu0 %v217
      %v294 = vpop.f32.mrf.mxu0
      %v295 = vadd.f32 %v235, %v294
      %v296 = vpop.f32.mrf.mxu0
      %v297 = vadd.f32 %v235, %v296
      %298 = vdwg.mxu0
      %v299 = vmax.f32 %v295, 0.0
      %v300 = vmax.f32 %v297, 0.0
      %v301 = vpack.c.bf16 %v300, %v299
      %s302 = scalar_lea.vmem [#allocation9], 64
      %v303 = vld [vmem:[%s302] sm:$0xf]
      %v304 = vld [vmem:[%s302 + $0x4] sm:$0xf]
      %v305 = vld [vmem:[%s302 + $0x8] sm:$0xf]
      %v306 = vld [vmem:[%s302 + $0xc] sm:$0xf]
      %v307 = vld [vmem:[%s302 + $0x10] sm:$0xf]
      %v308 = vld [vmem:[%s302 + $0x14] sm:$0xf]
      %v309 = vld [vmem:[%s302 + $0x18] sm:$0xf]
      %v310 = vld [vmem:[%s302 + $0x1c] sm:$0xf]
      %v311 = vld [vmem:[%s302 + $0x20] sm:$0xf]
      %v312 = vld [vmem:[%s302 + $0x24] sm:$0xf]
      %v313 = vld [vmem:[%s302 + $0x28] sm:$0xf]
      %v314 = vld [vmem:[%s302 + $0x2c] sm:$0xf]
      %v315 = vld [vmem:[%s302 + $0x30] sm:$0xf]
      %v316 = vld [vmem:[%s302 + $0x34] sm:$0xf]
      %v317 = vld [vmem:[%s302 + $0x38] sm:$0xf]
      %v318 = vld [vmem:[%s302 + $0x3c] sm:$0xf]
      %v320 = vperm.slane %v205, 0
      %v338 = vunpack.c.l.b16 %v303
      %v339 = vunpack.c.l.b16 %v304
      %v340 = vunpack.c.l.b16 %v305
      %v341 = vunpack.c.l.b16 %v306
      %v342 = vunpack.c.l.b16 %v307
      %v343 = vunpack.c.l.b16 %v308
      %v344 = vunpack.c.l.b16 %v309
      %v345 = vunpack.c.l.b16 %v310
      %v346 = vunpack.c.l.b16 %v311
      %v347 = vunpack.c.l.b16 %v312
      %v348 = vunpack.c.l.b16 %v313
      %v349 = vunpack.c.l.b16 %v314
      %v350 = vunpack.c.l.b16 %v315
      %v351 = vunpack.c.l.b16 %v316
      %v352 = vunpack.c.l.b16 %v317
      %v353 = vunpack.c.l.b16 %v318
      %v354 = vpack.c.b16 %v339, %v338
      %v355 = vpack.c.b16 %v341, %v340
      %v356 = vpack.c.b16 %v343, %v342
      %v357 = vpack.c.b16 %v345, %v344
      %v358 = vpack.c.b16 %v347, %v346
      %v359 = vpack.c.b16 %v349, %v348
      %v360 = vpack.c.b16 %v351, %v350
      %v361 = vpack.c.b16 %v353, %v352
      %370 = vmatpush.bf16.msra.mxu0 %v361
      %371 = vmatpush.bf16.msra.mxu0 %v360
      %372 = vmatpush.bf16.msra.mxu0 %v359
      %373 = vmatpush.bf16.msra.mxu0 %v358
      %374 = vmatpush.bf16.msra.mxu0 %v357
      %375 = vmatpush.bf16.msra.mxu0 %v356
      %376 = vmatpush.bf16.msra.mxu0 %v355
      %377 = vmatpush.bf16.msra.mxu0 %v354
      %378 = vmatmul.bf16.gmra.mxu0 %v301
      %v379 = vpop.f32.mrf.mxu0
      %v380 = vadd.f32 %v320, %v379
      %v381 = vpop.f32.mrf.mxu0
      %v382 = vadd.f32 %v320, %v381
      %383 = vdwg.mxu0
      %v384 = vmax.f32 %v380, 0.0
      %v385 = vmax.f32 %v382, 0.0
      %v386 = vpack.c.bf16 %v385, %v384
      %s387 = scalar_lea.vmem [#allocation9], 128
      %v388 = vld [vmem:[%s387] sm:$0xf]
      %v389 = vld [vmem:[%s387 + $0x4] sm:$0xf]
      %v390 = vld [vmem:[%s387 + $0x8] sm:$0xf]
      %v391 = vld [vmem:[%s387 + $0xc] sm:$0xf]
      %v392 = vld [vmem:[%s387 + $0x10] sm:$0xf]
      %v393 = vld [vmem:[%s387 + $0x14] sm:$0xf]
      %v394 = vld [vmem:[%s387 + $0x18] sm:$0xf]
      %v395 = vld [vmem:[%s387 + $0x1c] sm:$0xf]
      %v396 = vld [vmem:[%s387 + $0x20] sm:$0xf]
      %v397 = vld [vmem:[%s387 + $0x24] sm:$0xf]
      %v398 = vld [vmem:[%s387 + $0x28] sm:$0xf]
      %v399 = vld [vmem:[%s387 + $0x2c] sm:$0xf]
      %v400 = vld [vmem:[%s387 + $0x30] sm:$0xf]
      %v401 = vld [vmem:[%s387 + $0x34] sm:$0xf]
      %v402 = vld [vmem:[%s387 + $0x38] sm:$0xf]
      %v403 = vld [vmem:[%s387 + $0x3c] sm:$0xf]
      %v405 = vperm.slane %v206, 0
      %v423 = vunpack.c.l.b16 %v388
      %v424 = vunpack.c.l.b16 %v389
      %v425 = vunpack.c.l.b16 %v390
      %v426 = vunpack.c.l.b16 %v391
      %v427 = vunpack.c.l.b16 %v392
      %v428 = vunpack.c.l.b16 %v393
      %v429 = vunpack.c.l.b16 %v394
      %v430 = vunpack.c.l.b16 %v395
      %v431 = vunpack.c.l.b16 %v396
      %v432 = vunpack.c.l.b16 %v397
      %v433 = vunpack.c.l.b16 %v398
      %v434 = vunpack.c.l.b16 %v399
      %v435 = vunpack.c.l.b16 %v400
      %v436 = vunpack.c.l.b16 %v401
      %v437 = vunpack.c.l.b16 %v402
      %v438 = vunpack.c.l.b16 %v403
      %v439 = vpack.c.b16 %v424, %v423
      %v440 = vpack.c.b16 %v426, %v425
      %v441 = vpack.c.b16 %v428, %v427
      %v442 = vpack.c.b16 %v430, %v429
      %v443 = vpack.c.b16 %v432, %v431
      %v444 = vpack.c.b16 %v434, %v433
      %v445 = vpack.c.b16 %v436, %v435
      %v446 = vpack.c.b16 %v438, %v437
      %455 = vmatpush.bf16.msra.mxu0 %v446
      %456 = vmatpush.bf16.msra.mxu0 %v445
      %457 = vmatpush.bf16.msra.mxu0 %v444
      %458 = vmatpush.bf16.msra.mxu0 %v443
      %459 = vmatpush.bf16.msra.mxu0 %v442
      %460 = vmatpush.bf16.msra.mxu0 %v441
      %461 = vmatpush.bf16.msra.mxu0 %v440
      %462 = vmatpush.bf16.msra.mxu0 %v439
      %463 = vmatmul.bf16.gmra.mxu0 %v386
      %v464 = vpop.f32.mrf.mxu0
      %v465 = vadd.f32 %v405, %v464
      %v466 = vpop.f32.mrf.mxu0
      %v467 = vadd.f32 %v405, %v466
      %468 = vdwg.mxu0
      %v469 = vmax.f32 %v465, 0.0
      %v470 = vmax.f32 %v467, 0.0
      %v471 = vpack.c.bf16 %v470, %v469
      %s472 = scalar_lea.vmem [#allocation9], 192
      %v473 = vld [vmem:[%s472] sm:$0xf]
      %v474 = vld [vmem:[%s472 + $0x4] sm:$0xf]
      %v475 = vld [vmem:[%s472 + $0x8] sm:$0xf]
      %v476 = vld [vmem:[%s472 + $0xc] sm:$0xf]
      %v477 = vld [vmem:[%s472 + $0x10] sm:$0xf]
      %v478 = vld [vmem:[%s472 + $0x14] sm:$0xf]
      %v479 = vld [vmem:[%s472 + $0x18] sm:$0xf]
      %v480 = vld [vmem:[%s472 + $0x1c] sm:$0xf]
      %v481 = vld [vmem:[%s472 + $0x20] sm:$0xf]
      %v482 = vld [vmem:[%s472 + $0x24] sm:$0xf]
      %v483 = vld [vmem:[%s472 + $0x28] sm:$0xf]
      %v484 = vld [vmem:[%s472 + $0x2c] sm:$0xf]
      %v485 = vld [vmem:[%s472 + $0x30] sm:$0xf]
      %v486 = vld [vmem:[%s472 + $0x34] sm:$0xf]
      %v487 = vld [vmem:[%s472 + $0x38] sm:$0xf]
      %v488 = vld [vmem:[%s472 + $0x3c] sm:$0xf]
      %v490 = vperm.slane %v207, 0
      %v508 = vunpack.c.l.b16 %v473
      %v509 = vunpack.c.l.b16 %v474
      %v510 = vunpack.c.l.b16 %v475
      %v511 = vunpack.c.l.b16 %v476
      %v512 = vunpack.c.l.b16 %v477
      %v513 = vunpack.c.l.b16 %v478
      %v514 = vunpack.c.l.b16 %v479
      %v515 = vunpack.c.l.b16 %v480
      %v516 = vunpack.c.l.b16 %v481
      %v517 = vunpack.c.l.b16 %v482
      %v518 = vunpack.c.l.b16 %v483
      %v519 = vunpack.c.l.b16 %v484
      %v520 = vunpack.c.l.b16 %v485
      %v521 = vunpack.c.l.b16 %v486
      %v522 = vunpack.c.l.b16 %v487
      %v523 = vunpack.c.l.b16 %v488
      %v524 = vpack.c.b16 %v509, %v508
      %v525 = vpack.c.b16 %v511, %v510
      %v526 = vpack.c.b16 %v513, %v512
      %v527 = vpack.c.b16 %v515, %v514
      %v528 = vpack.c.b16 %v517, %v516
      %v529 = vpack.c.b16 %v519, %v518
      %v530 = vpack.c.b16 %v521, %v520
      %v531 = vpack.c.b16 %v523, %v522
      %540 = vmatpush.bf16.msra.mxu0 %v531
      %541 = vmatpush.bf16.msra.mxu0 %v530
      %542 = vmatpush.bf16.msra.mxu0 %v529
      %543 = vmatpush.bf16.msra.mxu0 %v528
      %544 = vmatpush.bf16.msra.mxu0 %v527
      %545 = vmatpush.bf16.msra.mxu0 %v526
      %546 = vmatpush.bf16.msra.mxu0 %v525
      %547 = vmatpush.bf16.msra.mxu0 %v524
      %548 = vmatmul.bf16.gmra.mxu0 %v471
      %v549 = vpop.f32.mrf.mxu0
      %v550 = vadd.f32 %v490, %v549
      %v551 = vpop.f32.mrf.mxu0
      %v552 = vadd.f32 %v490, %v551
      %553 = vdwg.mxu0
      %v554 = vmax.f32 %v550, 0.0
      %v555 = vmax.f32 %v552, 0.0
      %v556 = vpack.c.bf16 %v555, %v554
      %v557 = vld [vmem:[#allocation11] sm:$0xf]
      %v558 = vld [vmem:[#allocation11 + $0x4] sm:$0xf]
      %v559 = vld [vmem:[#allocation11 + $0x8] sm:$0xf]
      %v560 = vld [vmem:[#allocation11 + $0xc] sm:$0xf]
      %v561 = vld [vmem:[#allocation11 + $0x10] sm:$0xf]
      %v562 = vld [vmem:[#allocation11 + $0x14] sm:$0xf]
      %v563 = vld [vmem:[#allocation11 + $0x18] sm:$0xf]
      %v564 = vld [vmem:[#allocation11 + $0x1c] sm:$0xf]
      %v565 = vld [vmem:[#allocation11 + $0x20] sm:$0xf]
      %v566 = vld [vmem:[#allocation11 + $0x24] sm:$0xf]
      %v567 = vld [vmem:[#allocation11 + $0x28] sm:$0xf]
      %v568 = vld [vmem:[#allocation11 + $0x2c] sm:$0xf]
      %v569 = vld [vmem:[#allocation11 + $0x30] sm:$0xf]
      %v570 = vld [vmem:[#allocation11 + $0x34] sm:$0xf]
      %v571 = vld [vmem:[#allocation11 + $0x38] sm:$0xf]
      %v572 = vld [vmem:[#allocation11 + $0x3c] sm:$0xf]
      %v573 = vld [vmem:[%s5] sm:$0x1]
      %v575 = vperm.slane %v573, 0
      %v593 = vunpack.c.l.b16 %v557
      %v594 = vunpack.c.l.b16 %v558
      %v595 = vunpack.c.l.b16 %v559
      %v596 = vunpack.c.l.b16 %v560
      %v597 = vunpack.c.l.b16 %v561
      %v598 = vunpack.c.l.b16 %v562
      %v599 = vunpack.c.l.b16 %v563
      %v600 = vunpack.c.l.b16 %v564
      %v601 = vunpack.c.l.b16 %v565
      %v602 = vunpack.c.l.b16 %v566
      %v603 = vunpack.c.l.b16 %v567
      %v604 = vunpack.c.l.b16 %v568
      %v605 = vunpack.c.l.b16 %v569
      %v606 = vunpack.c.l.b16 %v570
      %v607 = vunpack.c.l.b16 %v571
      %v608 = vunpack.c.l.b16 %v572
      %v609 = vpack.c.b16 %v594, %v593
      %v610 = vpack.c.b16 %v596, %v595
      %v611 = vpack.c.b16 %v598, %v597
      %v612 = vpack.c.b16 %v600, %v599
      %v613 = vpack.c.b16 %v602, %v601
      %v614 = vpack.c.b16 %v604, %v603
      %v615 = vpack.c.b16 %v606, %v605
      %v616 = vpack.c.b16 %v608, %v607
      %625 = vmatpush.bf16.msra.mxu0 %v616
      %626 = vmatpush.bf16.msra.mxu0 %v615
      %627 = vmatpush.bf16.msra.mxu0 %v614
      %628 = vmatpush.bf16.msra.mxu0 %v613
      %629 = vmatpush.bf16.msra.mxu0 %v612
      %630 = vmatpush.bf16.msra.mxu0 %v611
      %631 = vmatpush.bf16.msra.mxu0 %v610
      %632 = vmatpush.bf16.msra.mxu0 %v609
      %633 = vmatmul.bf16.gmra.mxu0 %v556
      %v634 = vpop.f32.mrf.mxu0
      %v635 = vadd.f32 %v575, %v634
      %v636 = vpop.f32.mrf.mxu0
      %v637 = vadd.f32 %v575, %v636
      %638 = vdwg.mxu0
      %v639 = vpack.c.bf16 %v635, %v635
      %v640 = vpack.c.bf16 %v637, %v637
      %641 = vst [vmem:[#allocation12] sm:$0xf] %v639
      %642 = vst [vmem:[#allocation12 + $0x4] sm:$0xf] %v640
    $region53: #{tpu_custom_call.1} parent=1 // pred_fallthru
      _
    // Predicated region
    $region54: #{tpu_custom_call.1} parent=1 // pred_check
      _
    $region55: #{tpu_custom_call.1} parent=1 // pred_check_branch
      %644 = sbr.rel (0) target = $region57
    $region56: #{tpu_custom_call.1} parent=1 // pred_region
      %646 = vsyncadd [#allocation5], 0
      %s647 = sshll.u32 [#allocation12], 4
      %s648 = int_to_ptr.vmem [resolvable:$true] %s647
      %s649 = sshll.u32 %s6, 4
      %s650 = int_to_ptr.hbm [resolvable:$true] %s649
      %655 = dma.vmem_to_hbm [thread:$0]  %s648, 128, %s650, [#allocation5], 64, 64, 4
    $region57: #{tpu_custom_call.1} parent=1 // pred_fallthru
      _
    // Predicated region
    $region58: #{tpu_custom_call.1} parent=1 // pred_check
      _
    $region59: #{tpu_custom_call.1} parent=1 // pred_check_branch
      %657 = sbr.rel (0) target = $region61
    $region60: #{tpu_custom_call.1} parent=1 // pred_region
      %659 = dma.done [#allocation5], 128
    $region61: #{tpu_custom_call.1} parent=1 // pred_fallthru
      _
    %660 = vsyncpa [#allocation4], 1
    %661 = vsyncpa [#allocation7], 1
    %662 = vsyncpa [#allocation10], 1
    %663 = vsyncpa [#allocation5], 1

</llo_original>
